<compile_context>
chip_gen: v7x
topology: tpu7x:2x2x1
jax: 0.10.0
libtpu: 0.0.40
codegen_flags: <defaults>
</compile_context>

<pallas_src>
import functools
import math

import jax
import jax.numpy as jnp
from jax.experimental import pallas as pl
from jax.experimental.pallas import tpu as pltpu


# ----------------------------------------------------------------------------
# helpers
# ----------------------------------------------------------------------------
def _round_up(x, m):
    return (x + m - 1) // m * m


def _row_tiling(m):
    """Pick a row tile (multiple of 8) and the padded row count."""
    if m >= 2048:
        tm = 512
    elif m >= 256:
        tm = 256
    else:
        tm = max(8, _round_up(m, 8))
    return tm, _round_up(m, tm)


def _pad_rows(x2, m_pad):
    m = x2.shape[0]
    if m_pad == m:
        return x2
    return jnp.pad(x2, ((0, m_pad - m), (0, 0)))


def _ffn_tile(f):
    if f > 1024:
        for t in (512, 256, 128):
            if f % t == 0:
                return t
    return f


def _cparams(*sems):
    return pltpu.CompilerParams(dimension_semantics=tuple(sems),
                                vmem_limit_bytes=48 * 1024 * 1024)


# ----------------------------------------------------------------------------
# Pallas kernels
# ----------------------------------------------------------------------------
def _linear_kernel(x_ref, w_ref, b_ref, o_ref):
    x = x_ref[...].astype(jnp.bfloat16)
    w = w_ref[...].astype(jnp.bfloat16)
    acc = jnp.dot(x, w, preferred_element_type=jnp.float32) + b_ref[...]
    o_ref[...] = acc.astype(o_ref.dtype)


def _ln_kernel(x_ref, g_ref, b_ref, o_ref, *, eps):
    x = x_ref[...].astype(jnp.float32)
    mu = jnp.mean(x, axis=-1, keepdims=True)
    var = jnp.mean((x - mu) ** 2, axis=-1, keepdims=True)
    y = (x - mu) * jax.lax.rsqrt(var + eps)
    o_ref[...] = (y * g_ref[...] + b_ref[...]).astype(o_ref.dtype)


def _proj_add_ln_kernel(a_ref, res_ref, w_ref, b_ref, g_ref, bt_ref, o_ref, *, eps):
    """LayerNorm(residual + (a @ W + b))  -- fused MHA out-proj epilogue."""
    a = a_ref[...].astype(jnp.bfloat16)
    w = w_ref[...].astype(jnp.bfloat16)
    proj = jnp.dot(a, w, preferred_element_type=jnp.float32) + b_ref[...]
    x = res_ref[...].astype(jnp.float32) + proj
    mu = jnp.mean(x, axis=-1, keepdims=True)
    var = jnp.mean((x - mu) ** 2, axis=-1, keepdims=True)
    y = (x - mu) * jax.lax.rsqrt(var + eps)
    o_ref[...] = (y * g_ref[...] + bt_ref[...]).astype(o_ref.dtype)


def _ffn_add_ln_kernel(x_ref, w1_ref, b1_ref, w2_ref, b2_ref, g_ref, bt_ref,
                       o_ref, acc_ref, *, eps):
    """LayerNorm(x + relu(x@W1+b1)@W2+b2), tiled over the hidden F axis."""
    f_idx = pl.program_id(1)

    @pl.when(f_idx == 0)
    def _():
        acc_ref[...] = jnp.zeros_like(acc_ref)

    x = x_ref[...].astype(jnp.float32)
    xb = x.astype(jnp.bfloat16)
    h = jnp.dot(xb, w1_ref[...].astype(jnp.bfloat16),
                preferred_element_type=jnp.float32) + b1_ref[...]
    h = jnp.maximum(h, 0.0)  # ReLU (nn.Transformer default activation)
    acc_ref[...] += jnp.dot(h.astype(jnp.bfloat16), w2_ref[...].astype(jnp.bfloat16),
                            preferred_element_type=jnp.float32)

    @pl.when(f_idx == pl.num_programs(1) - 1)
    def _():
        y = x + acc_ref[...] + b2_ref[...]
        mu = jnp.mean(y, axis=-1, keepdims=True)
        var = jnp.mean((y - mu) ** 2, axis=-1, keepdims=True)
        z = (y - mu) * jax.lax.rsqrt(var + eps)
        o_ref[...] = (z * g_ref[...] + bt_ref[...]).astype(o_ref.dtype)


def _mha_kernel(*refs, nhead, scale, has_attn, has_pad, need_weights):
    """All-heads attention for one (batch, Sq-tile).  Heads batched in one dot."""
    i = 0
    q_ref = refs[i]; i += 1           # (1, tq, E)
    k_ref = refs[i]; i += 1           # (1, Sk, E)
    v_ref = refs[i]; i += 1           # (1, Sk, E)
    attn_ref = None
    pad_ref = None
    if has_attn:
        attn_ref = refs[i]; i += 1    # (tq, Sk) additive, shared across batch
    if has_pad:
        pad_ref = refs[i]; i += 1     # (1, 1, Sk) additive, per batch
    o_ref = refs[i]; i += 1           # (1, tq, E)
    w_ref = refs[i] if need_weights else None   # (1, tq, Sk)

    tq, e = q_ref.shape[1], q_ref.shape[2]
    sk = k_ref.shape[1]
    dh = e // nhead

    # fold scale into q once (tq*E muls instead of nhead*tq*Sk)
    q = q_ref[0].astype(jnp.float32) * scale
    k = k_ref[0].astype(jnp.float32)
    v = v_ref[0].astype(jnp.float32)

    qh = jnp.transpose(q.reshape(tq, nhead, dh), (1, 0, 2)).astype(jnp.bfloat16)
    kh = jnp.transpose(k.reshape(sk, nhead, dh), (1, 0, 2)).astype(jnp.bfloat16)
    vh = jnp.transpose(v.reshape(sk, nhead, dh), (1, 0, 2)).astype(jnp.bfloat16)

    # (h, tq, sk) scores, f32 accumulation
    s = jax.lax.dot_general(qh, kh, (((2,), (2,)), ((0,), (0,))),
                            preferred_element_type=jnp.float32)
    if has_attn:
        s = s + attn_ref[...][None, :, :]
    if has_pad:
        s = s + pad_ref[0][None, :, :]

    # softmax in f32.  NOTE: a fully-masked key row (all -inf) yields NaN,
    # matching PyTorch nn.MultiheadAttention behaviour for such rows.
    s = s - jnp.max(s, axis=-1, keepdims=True)
    p = jnp.exp(s)
    denom = jnp.sum(p, axis=-1, keepdims=True)
    p = p * pl.reciprocal(denom, approx=True)

    o = jax.lax.dot_general(p.astype(jnp.bfloat16), vh, (((2,), (1,)), ((0,), (0,))),
                            preferred_element_type=jnp.float32)   # (h, tq, dh)
    o_ref[0] = jnp.transpose(o, (1, 0, 2)).reshape(tq, e).astype(o_ref.dtype)
    if need_weights:
        w_ref[0] = jnp.mean(p, axis=0).astype(w_ref.dtype)   # head-averaged


# ----------------------------------------------------------------------------
# Pallas wrappers
# ----------------------------------------------------------------------------
def linear(x, w, b):
    """x: (..., K), w: (K, N) [bf16 ok], b: (N,) -> (..., N) f32."""
    lead = x.shape[:-1]
    k_dim = x.shape[-1]
    n_dim = w.shape[1]
    x2 = x.reshape(-1, k_dim)
    m = x2.shape[0]
    tm, m_pad = _row_tiling(m)
    x2 = _pad_rows(x2, m_pad)
    out = pl.pallas_call(
        _linear_kernel,
        grid=(m_pad // tm,),
        in_specs=[pl.BlockSpec((tm, k_dim), lambda i: (i, 0)),
                  pl.BlockSpec((k_dim, n_dim), lambda i: (0, 0)),
                  pl.BlockSpec((1, n_dim), lambda i: (0, 0))],
        out_specs=pl.BlockSpec((tm, n_dim), lambda i: (i, 0)),
        out_shape=jax.ShapeDtypeStruct((m_pad, n_dim), jnp.float32),
        compiler_params=_cparams("parallel"),
    )(x2, w, b.reshape(1, n_dim))
    return out[:m].reshape(*lead, n_dim)


def layer_norm(x, g, b, eps=1e-5):
    lead = x.shape[:-1]
    d = x.shape[-1]
    x2 = x.reshape(-1, d)
    m = x2.shape[0]
    tm, m_pad = _row_tiling(m)
    x2 = _pad_rows(x2, m_pad)
    out = pl.pallas_call(
        functools.partial(_ln_kernel, eps=eps),
        grid=(m_pad // tm,),
        in_specs=[pl.BlockSpec((tm, d), lambda i: (i, 0)),
                  pl.BlockSpec((1, d), lambda i: (0, 0)),
                  pl.BlockSpec((1, d), lambda i: (0, 0))],
        out_specs=pl.BlockSpec((tm, d), lambda i: (i, 0)),
        out_shape=jax.ShapeDtypeStruct((m_pad, d), jnp.float32),
        compiler_params=_cparams("parallel"),
    )(x2, g.reshape(1, d), b.reshape(1, d))
    return out[:m].reshape(*lead, d)


def proj_add_ln(a, res, w, b, g, beta, eps=1e-5):
    """LayerNorm(res + a @ w + b) fused."""
    lead = a.shape[:-1]
    e = a.shape[-1]
    a2 = a.reshape(-1, e)
    r2 = res.reshape(-1, e)
    m = a2.shape[0]
    tm, m_pad = _row_tiling(m)
    a2 = _pad_rows(a2, m_pad)
    r2 = _pad_rows(r2, m_pad)
    out = pl.pallas_call(
        functools.partial(_proj_add_ln_kernel, eps=eps),
        grid=(m_pad // tm,),
        in_specs=[pl.BlockSpec((tm, e), lambda i: (i, 0)),
                  pl.BlockSpec((tm, e), lambda i: (i, 0)),
                  pl.BlockSpec((e, e), lambda i: (0, 0)),
                  pl.BlockSpec((1, e), lambda i: (0, 0)),
                  pl.BlockSpec((1, e), lambda i: (0, 0)),
                  pl.BlockSpec((1, e), lambda i: (0, 0))],
        out_specs=pl.BlockSpec((tm, e), lambda i: (i, 0)),
        out_shape=jax.ShapeDtypeStruct((m_pad, e), jnp.float32),
        compiler_params=_cparams("parallel"),
    )(a2, r2, w, b.reshape(1, e), g.reshape(1, e), beta.reshape(1, e))
    return out[:m].reshape(*lead, e)


def ffn_add_ln(x, w1, b1, w2, b2, g, beta, eps=1e-5):
    """LayerNorm(x + relu(x@w1+b1)@w2+b2) fused, F-axis tiled."""
    lead = x.shape[:-1]
    e = x.shape[-1]
    f = w1.shape[1]
    x2 = x.reshape(-1, e)
    m = x2.shape[0]
    tm, m_pad = _row_tiling(m)
    x2 = _pad_rows(x2, m_pad)
    tf = _ffn_tile(f)
    out = pl.pallas_call(
        functools.partial(_ffn_add_ln_kernel, eps=eps),
        grid=(m_pad // tm, f // tf),
        in_specs=[pl.BlockSpec((tm, e), lambda i, j: (i, 0)),
                  pl.BlockSpec((e, tf), lambda i, j: (0, j)),
                  pl.BlockSpec((1, tf), lambda i, j: (0, j)),
                  pl.BlockSpec((tf, e), lambda i, j: (j, 0)),
                  pl.BlockSpec((1, e), lambda i, j: (0, 0)),
                  pl.BlockSpec((1, e), lambda i, j: (0, 0)),
                  pl.BlockSpec((1, e), lambda i, j: (0, 0))],
        out_specs=pl.BlockSpec((tm, e), lambda i, j: (i, 0)),
        out_shape=jax.ShapeDtypeStruct((m_pad, e), jnp.float32),
        scratch_shapes=[pltpu.VMEM((tm, e), jnp.float32)],
        compiler_params=_cparams("parallel", "arbitrary"),
    )(x2, w1, b1.reshape(1, f), w2, b2.reshape(1, e),
      g.reshape(1, e), beta.reshape(1, e))
    return out[:m].reshape(*lead, e)


def mha_attention(e, nhead, q_src, q_off, k_src, k_off, v_src, v_off, *,
                  attn_mask=None, key_pad=None, need_weights=False):
    """Multi-head attention.

    q_src: (B, Sq, nq*E)  -- Q is lane-block `q_off` of the last dim.
    k_src/v_src: (B, Sk, nk*E) -- K/V lane-blocks `k_off`/`v_off`.
    attn_mask: (Sq, Sk) additive f32, shared across batch (or None).
    key_pad:  (B, Sk) bool, True = masked key (or None).
    Returns (out (B, Sq, E) f32, head-averaged weights (B, Sq, Sk) or None).
    """
    b = q_src.shape[0]
    sq = q_src.shape[1]
    sk = k_src.shape[1]
    dh = e // nhead
    scale = 1.0 / math.sqrt(dh)

    tq = min(256, max(8, _round_up(sq, 8)))
    sq_pad = _round_up(sq, tq)
    qs = q_src
    am = attn_mask
    if sq_pad != sq:
        qs = jnp.pad(q_src, ((0, 0), (0, sq_pad - sq), (0, 0)))
        if am is not None:
            am = jnp.pad(am, ((0, sq_pad - sq), (0, 0)))

    pad_add = None
    if key_pad is not None:
        pad_add = jnp.where(key_pad, -jnp.inf, 0.0).astype(jnp.float32).reshape(b, 1, sk)

    has_attn = am is not None
    has_pad = pad_add is not None

    in_specs = [pl.BlockSpec((1, tq, e), lambda bi, i: (bi, i, q_off)),
                pl.BlockSpec((1, sk, e), lambda bi, i: (bi, 0, k_off)),
                pl.BlockSpec((1, sk, e), lambda bi, i: (bi, 0, v_off))]
    inputs = [qs, k_src, v_src]
    if has_attn:
        in_specs.append(pl.BlockSpec((tq, sk), lambda bi, i: (i, 0)))
        inputs.append(am)
    if has_pad:
        in_specs.append(pl.BlockSpec((1, 1, sk), lambda bi, i: (bi, 0, 0)))
        inputs.append(pad_add)

    kernel = functools.partial(_mha_kernel, nhead=nhead, scale=scale,
                               has_attn=has_attn, has_pad=has_pad,
                               need_weights=need_weights)
    grid = (b, sq_pad // tq)
    cp = _cparams("parallel", "parallel")

    if need_weights:
        out, w = pl.pallas_call(
            kernel, grid=grid, in_specs=in_specs,
            out_specs=[pl.BlockSpec((1, tq, e), lambda bi, i: (bi, i, 0)),
                       pl.BlockSpec((1, tq, sk), lambda bi, i: (bi, i, 0))],
            out_shape=(jax.ShapeDtypeStruct((b, sq_pad, e), jnp.float32),
                       jax.ShapeDtypeStruct((b, sq_pad, sk), jnp.float32)),
            compiler_params=cp,
        )(*inputs)
        return out[:, :sq, :], w[:, :sq, :]

    out = pl.pallas_call(
        kernel, grid=grid, in_specs=in_specs,
        out_specs=pl.BlockSpec((1, tq, e), lambda bi, i: (bi, i, 0)),
        out_shape=jax.ShapeDtypeStruct((b, sq_pad, e), jnp.float32),
        compiler_params=cp,
    )(*inputs)
    return out[:, :sq, :], None


# ----------------------------------------------------------------------------
# Transformer building blocks (plain-JAX glue around Pallas kernels)
# ----------------------------------------------------------------------------
def self_attn_block(p, x, nhead, attn_mask, key_pad, need_weights):
    e = x.shape[-1]
    qkv = linear(x, p["w_qkv"], p["b_qkv"])                  # (B, S, 3E) packed
    if e % 128 == 0:
        # feed packed QKV directly; lane-block BlockSpecs pick Q/K/V windows
        return mha_attention(e, nhead, qkv, 0, qkv, 1, qkv, 2,
                             attn_mask=attn_mask, key_pad=key_pad,
                             need_weights=need_weights)
    q, k, v = qkv[..., :e], qkv[..., e:2 * e], qkv[..., 2 * e:]
    return mha_attention(e, nhead, q, 0, k, 0, v, 0,
                         attn_mask=attn_mask, key_pad=key_pad,
                         need_weights=need_weights)


def cross_attn_block(p, x, memory, nhead, attn_mask, key_pad, need_weights):
    e = x.shape[-1]
    q = linear(x, p["w_q"], p["b_q"])                        # (B, St, E)
    kv = linear(memory, p["w_kv"], p["b_kv"])                # (B, Ss, 2E) packed
    if e % 128 == 0:
        return mha_attention(e, nhead, q, 0, kv, 0, kv, 1,
                             attn_mask=attn_mask, key_pad=key_pad,
                             need_weights=need_weights)
    k, v = kv[..., :e], kv[..., e:]
    return mha_attention(e, nhead, q, 0, k, 0, v, 0,
                         attn_mask=attn_mask, key_pad=key_pad,
                         need_weights=need_weights)


def encoder_layer(p, x, nhead, src_key_pad):
    sa = p["self_attn"]
    a, _ = self_attn_block(sa, x, nhead, None, src_key_pad, need_weights=False)
    x = proj_add_ln(a, x, sa["wo"], sa["bo"], p["ln1_g"], p["ln1_b"])
    x = ffn_add_ln(x, p["w1"], p["b1"], p["w2"], p["b2"], p["ln2_g"], p["ln2_b"])
    return x


def decoder_layer(p, x, memory, nhead, tgt_attn_mask, tgt_key_pad, mem_key_pad):
    sa = p["self_attn"]
    a, w_sa = self_attn_block(sa, x, nhead, tgt_attn_mask, tgt_key_pad,
                              need_weights=True)
    x = proj_add_ln(a, x, sa["wo"], sa["bo"], p["ln1_g"], p["ln1_b"])
    ca = p["cross_attn"]
    a2, w_mha = cross_attn_block(ca, x, memory, nhead, None, mem_key_pad,
                                 need_weights=True)
    x = proj_add_ln(a2, x, ca["wo"], ca["bo"], p["ln2_g"], p["ln2_b"])
    x = ffn_add_ln(x, p["w1"], p["b1"], p["w2"], p["b2"], p["ln3_g"], p["ln3_b"])
    return x, w_sa, w_mha


def get_tgt_mask(size):
    tri = jnp.tril(jnp.ones((size, size), jnp.float32))
    return jnp.where(tri == 0, -jnp.inf, 0.0).astype(jnp.float32)


def make_pos_encoding(d_model, max_len=200):
    pos = jnp.arange(max_len, dtype=jnp.float32)[:, None]
    div = jnp.exp(jnp.arange(0, d_model, 2, dtype=jnp.float32)
                  * (-math.log(10000.0) / d_model))
    pe = jnp.zeros((max_len, d_model), jnp.float32)
    pe = pe.at[:, 0::2].set(jnp.sin(pos * div))
    pe = pe.at[:, 1::2].set(jnp.cos(pos * div))
    return pe[None]  # (1, max_len, d_model)


def transformer_forward(params, src, tgt, tgt_mask=None, src_pad_mask=None,
                        tgt_pad_mask=None):
    nhead = params["nhead"]

    # src / tgt embedding (mirrors the PyTorch module forward)
    src_e = linear(src, params["linear_src_w"], params["linear_src_b"])
    tok = jax.nn.one_hot(tgt[:, :, -1].astype(jnp.int32), 4, dtype=tgt.dtype)
    tgt_cat = jnp.concatenate([tgt[:, :, :-1], tok], axis=2)
    tgt_e = linear(tgt_cat, params["linear_tgt_w"], params["linear_tgt_b"])
    tgt_e = tgt_e + params["pos_encoding"][:, :tgt_e.shape[1], :]

    # encoder stack (+ final LayerNorm, as in nn.Transformer)
    mem = src_e
    for lp in params["encoder_layers"]:
        mem = encoder_layer(lp, mem, nhead, src_pad_mask)
    mem = layer_norm(mem, params["enc_norm_g"], params["enc_norm_b"])

    # decoder stack (+ final LayerNorm), collecting attention weights per layer.
    # memory_key_padding_mask is None in the original module's call.
    x = tgt_e
    dec_sa, dec_mha = [], []
    for lp in params["decoder_layers"]:
        x, w_sa, w_mha = decoder_layer(lp, x, mem, nhead, tgt_mask,
                                       tgt_pad_mask, None)
        dec_sa.append(w_sa)
        dec_mha.append(w_mha)
    x = layer_norm(x, params["dec_norm_g"], params["dec_norm_b"])

    out = linear(x, params["linear_out_w"], params["linear_out_b"])
    return out, [], dec_sa, dec_mha


# ----------------------------------------------------------------------------
# deterministic parameter init (synthetic; shapes per module __init__)
# ----------------------------------------------------------------------------
def init_params(key, src_dim, tgt_dim, d_model, nhead, num_encoder_layers,
                num_decoder_layers, dim_feedforward=2048, max_len=200):
    keys = iter(jax.random.split(key, 512))

    def lin(i, o):
        bound = 1.0 / math.sqrt(i)
        w = jax.random.uniform(next(keys), (i, o), jnp.float32, -bound, bound)
        b = jax.random.uniform(next(keys), (o,), jnp.float32, -bound, bound)
        return w.astype(jnp.bfloat16), b   # bf16 weights, f32 biases

    def self_attn_params():
        w_qkv, b_qkv = lin(d_model, 3 * d_model)   # packed in_proj, transposed
        wo, bo = lin(d_model, d_model)
        return {"w_qkv": w_qkv, "b_qkv": b_qkv, "wo": wo, "bo": bo}

    def cross_attn_params():
        w_q, b_q = lin(d_model, d_model)
        w_kv, b_kv = lin(d_model, 2 * d_model)     # packed KV, pre-split from Q
        wo, bo = lin(d_model, d_model)
        return {"w_q": w_q, "b_q": b_q, "w_kv": w_kv, "b_kv": b_kv,
                "wo": wo, "bo": bo}

    def enc_layer_params():
        p = {"self_attn": self_attn_params()}
        p["w1"], p["b1"] = lin(d_model, dim_feedforward)
        p["w2"], p["b2"] = lin(dim_feedforward, d_model)
        for n in ("ln1", "ln2"):
            p[n + "_g"] = jnp.ones((d_model,), jnp.float32)
            p[n + "_b"] = jnp.zeros((d_model,), jnp.float32)
        return p

    def dec_layer_params():
        p = {"self_attn": self_attn_params(), "cross_attn": cross_attn_params()}
        p["w1"], p["b1"] = lin(d_model, dim_feedforward)
        p["w2"], p["b2"] = lin(dim_feedforward, d_model)
        for n in ("ln1", "ln2", "ln3"):
            p[n + "_g"] = jnp.ones((d_model,), jnp.float32)
            p[n + "_b"] = jnp.zeros((d_model,), jnp.float32)
        return p

    params = {"nhead": nhead, "pos_encoding": make_pos_encoding(d_model, max_len)}
    params["linear_src_w"], params["linear_src_b"] = lin(src_dim, d_model)
    params["linear_tgt_w"], params["linear_tgt_b"] = lin(tgt_dim + 3, d_model)
    params["encoder_layers"] = [enc_layer_params() for _ in range(num_encoder_layers)]
    params["decoder_layers"] = [dec_layer_params() for _ in range(num_decoder_layers)]
    params["enc_norm_g"] = jnp.ones((d_model,), jnp.float32)
    params["enc_norm_b"] = jnp.zeros((d_model,), jnp.float32)
    params["dec_norm_g"] = jnp.ones((d_model,), jnp.float32)
    params["dec_norm_b"] = jnp.zeros((d_model,), jnp.float32)
    params["linear_out_w"], params["linear_out_b"] = lin(d_model, tgt_dim + 3)
    return params


# ----------------------------------------------------------------------------
if __name__ == "__main__":
    # small shapes consistent with the module
    B = 2
    src_dim, tgt_dim = 6, 5
    d_model, nhead = 128, 4
    num_enc, num_dec = 2, 2
    dim_ff = 256
    Ss, St = 8, 8

    key = jax.random.PRNGKey(0)
    k_params, k_src, k_tgtf, k_tok = jax.random.split(key, 4)

    params = init_params(k_params, src_dim, tgt_dim, d_model, nhead,
                         num_enc, num_dec, dim_feedforward=dim_ff)

    src = jax.random.normal(k_src, (B, Ss, src_dim), dtype=jnp.float32)
    tgt_feats = jax.random.normal(k_tgtf, (B, St, tgt_dim - 1), dtype=jnp.float32)
    tgt_tokens = jax.random.randint(k_tok, (B, St, 1), 0, 4).astype(jnp.float32)
    tgt = jnp.concatenate([tgt_feats, tgt_tokens], axis=2)   # last channel = token id

    tgt_mask = get_tgt_mask(St)

    # run 1: causal tgt mask, no padding masks (mask-less encoder / cross paths)
    out, enc_w, dec_sa, dec_mha = transformer_forward(
        params, src, tgt, tgt_mask=tgt_mask, src_pad_mask=None, tgt_pad_mask=None)
    out = jax.block_until_ready(out)
    for w in dec_sa + dec_mha:
        jax.block_until_ready(w)

    assert out.shape == (B, St, tgt_dim + 3)
    assert len(dec_sa) == num_dec and dec_sa[0].shape == (B, St, St)
    assert len(dec_mha) == num_dec and dec_mha[0].shape == (B, St, Ss)
    assert bool(jnp.all(jnp.isfinite(out)))

    # run 2: exercise the key-padding-mask path (last src position padded)
    src_pad = jnp.zeros((B, Ss), dtype=bool).at[:, -1].set(True)
    out2, _, _, _ = transformer_forward(
        params, src, tgt, tgt_mask=tgt_mask, src_pad_mask=src_pad, tgt_pad_mask=None)
    out2 = jax.block_until_ready(out2)
    assert out2.shape == (B, St, tgt_dim + 3)
    assert bool(jnp.all(jnp.isfinite(out2)))

    print("KERNEL_OK")
</pallas_src>

<mosaic_0001>
module attributes {stable_mosaic.version = 11 : i64} {
  func.func @_linear_kernel(%arg0: i32, %arg1: memref<16x6xf32, #tpu.memory_space<vmem>>, %arg2: memref<6x128xbf16, #tpu.memory_space<vmem>>, %arg3: memref<1x128xf32, #tpu.memory_space<vmem>>, %arg4: memref<16x128xf32, #tpu.memory_space<vmem>>) attributes {dimension_semantics = [#tpu.dimension_semantics<parallel>], iteration_bounds = array<i64: 1>, scalar_prefetch = 0 : i64, scratch_operands = 0 : i64, tpu.core_type = #tpu.core_type<tc>, window_params = [{transform_indices = @transform_0, window_bounds = array<i64: 16, 6>}, {pipeline_mode = #tpu.pipeline_mode<synchronous>, transform_indices = @transform_1, window_bounds = array<i64: 6, 128>}, {pipeline_mode = #tpu.pipeline_mode<synchronous>, transform_indices = @transform_2, window_bounds = array<i64: 1, 128>}, {transform_indices = @transform_3, window_bounds = array<i64: 16, 128>}]} {
    %c0 = arith.constant 0 : index
    %c0_0 = arith.constant 0 : index
    %0 = vector.load %arg1[%c0, %c0_0] : memref<16x6xf32, #tpu.memory_space<vmem>>, vector<16x6xf32>
    %1 = arith.truncf %0 : vector<16x6xf32> to vector<16x6xbf16>
    %c0_1 = arith.constant 0 : index
    %c0_2 = arith.constant 0 : index
    %2 = vector.load %arg2[%c0_1, %c0_2] : memref<6x128xbf16, #tpu.memory_space<vmem>>, vector<6x128xbf16>
    %cst = arith.constant dense<0.000000e+00> : vector<16x128xf32>
    %3 = tpu.matmul %1, %2, %cst {dimension_numbers = #tpu.dot_dimension_numbers<[1], [0], [0], [1], [0, 0, 1, 1], [], []>} : vector<16x6xbf16>, vector<6x128xbf16>, vector<16x128xf32> -> vector<16x128xf32>
    %c0_3 = arith.constant 0 : index
    %c0_4 = arith.constant 0 : index
    %4 = vector.load %arg3[%c0_3, %c0_4] : memref<1x128xf32, #tpu.memory_space<vmem>>, vector<1x128xf32>
    %5 = vector.broadcast %4 : vector<1x128xf32> to vector<16x128xf32>
    %6 = arith.addf %3, %5 : vector<16x128xf32>
    %c0_5 = arith.constant 0 : index
    %c0_6 = arith.constant 0 : index
    %7 = vector.load %arg4[%c0_5, %c0_6] : memref<16x128xf32, #tpu.memory_space<vmem>>, vector<16x128xf32>
    tpu.vector_store %arg4[%c0_5, %c0_6], %6 {strides = array<i32>} : memref<16x128xf32, #tpu.memory_space<vmem>>, vector<16x128xf32>,
    return
  }
  func.func @transform_0(%arg0: i32) -> (i32, i32) {
    %c0_i32 = arith.constant 0 : i32
    %c0_i32_0 = arith.constant 0 : i32
    return %arg0, %c0_i32 : i32, i32
  }
  func.func @transform_1(%arg0: i32) -> (i32, i32) {
    %c0_i32 = arith.constant 0 : i32
    %c0_i32_0 = arith.constant 0 : i32
    %c0_i32_1 = arith.constant 0 : i32
    return %c0_i32, %c0_i32_0 : i32, i32
  }
  func.func @transform_2(%arg0: i32) -> (i32, i32) {
    %c0_i32 = arith.constant 0 : i32
    %c0_i32_0 = arith.constant 0 : i32
    %c0_i32_1 = arith.constant 0 : i32
    return %c0_i32, %c0_i32_0 : i32, i32
  }
  func.func @transform_3(%arg0: i32) -> (i32, i32) {
    %c0_i32 = arith.constant 0 : i32
    %c0_i32_0 = arith.constant 0 : i32
    return %arg0, %c0_i32 : i32, i32
  }
}

</mosaic_0001>

<llo_original>
// kernel: tpu_custom_call.1
$region0: #{tpu_custom_call.1}
  #allocation0 [shape = 'u32[]', space=smem, size = 0x4, offset = 0x4, fixed_abs, tag = 'smem constant byte address 0x4 - core index']
  #allocation1 [shape = 'u32[144,128]{1,0:T(1,128)}', space=vmem, size = 0x12000, scoped, tag = 'internal scratch']
  %s0 = inlined_call_operand.vmem [shape: f32[16,6], index: 0, kind: input, shape index: {}]
  %s1 = inlined_call_operand.vmem [shape: bf16[6,128], index: 1, kind: input, shape index: {}]
  %s2 = inlined_call_operand.vmem [shape: f32[1,128], index: 2, kind: input, shape index: {}]
  %s3 = inlined_call_operand.hbm [shape: f32[16,128], index: 3, kind: output, shape index: {}]
  %s4 = sld [smem:[#allocation0]]
  $region22: #{tpu_custom_call.1} parent=0
    _
  %s6 = ssub.s32 1, %s4
  %s7 = scalar_select 0, %s6, %s4
  $region1: #{tpu_custom_call.1} parent=0
    #allocation2 [shape = 'u8[8192]{0}', space=vmem, size = 0x2000, scoped, tag = 'output window, operand 0, single buffered']
    #allocation3 [shape = 's32[1]{0}', space=sflag, size = 0x4, scoped, tag = 'scoped memory for tpu_custom_call.1']
    %8 = vsyncpa [#allocation3], 0
    // Predicated region
    $region2: #{tpu_custom_call.1} parent=1 // pred_check
      _
    $region3: #{tpu_custom_call.1} parent=1 // pred_check_branch
      %10 = sbr.rel (0) target = $region5
    $region4: #{tpu_custom_call.1} parent=1 // pred_region
      _
    $region5: #{tpu_custom_call.1} parent=1 // pred_fallthru
      _
    // Predicated region
    $region6: #{tpu_custom_call.1} parent=1 // pred_check
      _
    $region7: #{tpu_custom_call.1} parent=1 // pred_check_branch
      %12 = sbr.rel (0) target = $region9
    $region8: #{tpu_custom_call.1} parent=1 // pred_region
      _
    $region9: #{tpu_custom_call.1} parent=1 // pred_fallthru
      _
    // Predicated region
    $region10: #{tpu_custom_call.1} parent=1 // pred_check
      _
    $region11: #{tpu_custom_call.1} parent=1 // pred_check_branch
      %14 = sbr.rel (0) target = $region13
    $region12: #{tpu_custom_call.1} parent=1 // pred_region
      _
    $region13: #{tpu_custom_call.1} parent=1 // pred_fallthru
      _
    %v16 = vld [vmem:[%s0] sm:$0xff]
    %v17 = vld [vmem:[%s0 + $0x8] sm:$0xff]
    %v18 = vpack.c.bf16 %v17, %v16
    %v19 = vld [vmem:[%s1] sm:$0x7]
    %v20 = vld [vmem:[%s2] sm:$0x1]
    %v22 = vlaneseq
    %v23 = vshrl.u32 %v22, 7
    %v24 = vsub.s32 0, %v23
    %v25 = vrot.slane %v20, %v24
    %vm27 = vcmask 48128
    %v29 = vsel %vm27, %v18, 0
    %vm31 = vcmask 1042432
    %v33 = vsel %vm31, %v19, 0
    %35 = vmatprep.subr.bf16.mxu0 0
    %36 = vmatpush1.bf16.msra.mxu0 %v33
    %37 = vmatprep.subr.bf16.mxu0 0
    %38 = vmatpush1.bf16.msra.mxu0 0
    %39 = vmatprep.subr.bf16.mxu0 0
    %40 = vmatpush1.bf16.msra.mxu0 0
    %41 = vmatprep.subr.bf16.mxu0 0
    %42 = vmatpush1.bf16.msra.mxu0 0
    %43 = vmatprep.subr.bf16.mxu0 0
    %44 = vmatpush1.bf16.msra.mxu0 0
    %45 = vmatprep.subr.bf16.mxu0 0
    %46 = vmatpush1.bf16.msra.mxu0 0
    %47 = vmatprep.subr.bf16.mxu0 0
    %48 = vmatpush1.bf16.msra.mxu0 0
    %49 = vmatprep.subr.bf16.mxu0 0
    %50 = vmatpush1.bf16.msra.mxu0 0
    %51 = vmatprep.subr.bf16.mxu0 0
    %52 = vmatpush1.bf16.msra.mxu0 0
    %53 = vmatprep.subr.bf16.mxu0 0
    %54 = vmatpush1.bf16.msra.mxu0 0
    %55 = vmatprep.subr.bf16.mxu0 0
    %56 = vmatpush1.bf16.msra.mxu0 0
    %57 = vmatprep.subr.bf16.mxu0 0
    %58 = vmatpush1.bf16.msra.mxu0 0
    %59 = vmatprep.subr.bf16.mxu0 0
    %60 = vmatpush1.bf16.msra.mxu0 0
    %61 = vmatprep.subr.bf16.mxu0 0
    %62 = vmatpush1.bf16.msra.mxu0 0
    %63 = vmatprep.subr.bf16.mxu0 0
    %64 = vmatpush1.bf16.msra.mxu0 0
    %65 = vmatprep.subr.bf16.mxu0 0
    %66 = vmatpush1.bf16.msra.mxu0 0
    %67 = vmatprep.mubr.bf16.mxu0 0
    %68 = vmatmul.mubr.bf16.gmra.mrb[0].mxu0 %v29
    %v69 = vpop.f32.mrb[0].mxu0
    %v70 = vadd.f32 %v25, %v69
    %v71 = vpop.f32.mrb[0].mxu0
    %v72 = vpop.f32.mrb[0].mxu0
    %v73 = vadd.f32 %v25, %v72
    %v74 = vpop.f32.mrb[0].mxu0
    %75 = vdwg.mxu0
    %76 = vst [vmem:[#allocation2] sm:$0xff] %v70
    %77 = vst [vmem:[#allocation2 + $0x8] sm:$0xff] %v73
    // Predicated region
    $region14: #{tpu_custom_call.1} parent=1 // pred_check
      _
    $region15: #{tpu_custom_call.1} parent=1 // pred_check_branch
      %79 = sbr.rel (0) target = $region17
    $region16: #{tpu_custom_call.1} parent=1 // pred_region
      %s81 = ssub.s32 256, 256
      %82 = vsyncadd [#allocation3], %s81
      %s83 = sshll.u32 [#allocation2], 4
      %s84 = int_to_ptr.vmem [resolvable:$true] %s83
      %89 = dma.vmem_to_hbm [thread:$0]  %s84, 256, %s3, [#allocation3], 128, 128, 8
    $region17: #{tpu_custom_call.1} parent=1 // pred_fallthru
      _
    // Predicated region
    $region18: #{tpu_custom_call.1} parent=1 // pred_check
      _
    $region19: #{tpu_custom_call.1} parent=1 // pred_check_branch
      %91 = sbr.rel (0) target = $region21
    $region20: #{tpu_custom_call.1} parent=1 // pred_region
      %92 = dma.done [#allocation3], 256
    $region21: #{tpu_custom_call.1} parent=1 // pred_fallthru
      _
    %93 = vsyncpa [#allocation3], 1

</llo_original>
